<compile_context>
chip_gen: v7x
topology: tpu7x:2x2x1
jax: 0.10.0
libtpu: 0.0.40
codegen_flags: <defaults>
</compile_context>

<pallas_src>
import jax
import jax.numpy as jnp
from jax.experimental import pallas as pl
from jax.experimental.pallas import tpu as pltpu

ALPHA = 1.0
GAMMA = 2.0

NUM_CORE_SPLITS = 2           # v7x has 2 TensorCores; extra split is harmless (serial) on v5e/v6e
_OUT_SUB, _OUT_LANE = 8, 128  # one (8,128) f32 output slab per core (always layout-legal)
_VMEM_LIMIT_BYTES = 48 << 20  # explicit scoped-VMEM limit: > v5e's 16 MiB default, < v7x's 64 MiB physical


def _round_up(x, m):
    return (x + m - 1) // m * m


def _pick_tile_n(n, c, itemsize, max_tile=32768, vmem_budget_bytes=24 << 20):
    """Rows per logits tile, sized by the *real* working set.

    Per-row bytes = double-buffered native-dtype logits tile (2 * C * itemsize)
    + live in-kernel f32/i32 temporaries (x upcast, exp(x-m), column iota,
    target-select tile) ~= 4 * C * 4, + small per-row (tile, 1) intermediates.
    A 24 MiB working-set budget stays well inside the 48 MiB vmem_limit we pass
    and inside v7x's 64 MiB physical VMEM.
    """
    bytes_per_row = 2 * c * itemsize + 4 * c * 4 + 32
    if n * bytes_per_row <= vmem_budget_bytes and n <= max_tile:
        return n
    cap = (vmem_budget_bytes // bytes_per_row) // 8 * 8
    return int(max(8, min(max_tile, cap)))


def _make_kernel(n, c, tile_n, tiles_per_core):
    def kernel(logits_ref, targets_ref, out_ref):
        core = pl.program_id(0)   # parallel axis (one per TensorCore on v7x)
        i = pl.program_id(1)      # arbitrary (reduction) axis over this core's tiles

        @pl.when(i == 0)
        def _():
            out_ref[...] = jnp.zeros_like(out_ref)

        x = logits_ref[...].astype(jnp.float32)        # (tile_n, C): f32 upcast on the VMEM tile
        tgt = targets_ref[...]                         # (tile_n, 1) int32

        # Logical (unclamped) block index -> true row ids, for ragged / overhang masking.
        lb = core * tiles_per_core + i
        row = lb * tile_n + jax.lax.broadcasted_iota(jnp.int32, (tile_n, 1), 0)
        valid = row < n                                # (tile_n, 1) bool

        # Numerically stable per-row logsumexp (no full-tile pre-mask: any garbage
        # in invalid rows stays row-local and is removed by the select below).
        m = jnp.max(x, axis=-1, keepdims=True)
        lse = m + jnp.log(jnp.sum(jnp.exp(x - m), axis=-1, keepdims=True))

        # Gather logits[r, target_r] via iota-compare select (no dense one-hot input).
        cols = jax.lax.broadcasted_iota(jnp.int32, (tile_n, c), 1)
        tgt_logit = jnp.sum(jnp.where(cols == tgt, x, 0.0), axis=-1, keepdims=True)

        per_row_ce = jnp.where(valid, lse - tgt_logit, 0.0)     # (tile_n, 1)
        # Broadcast-add this tile's partial sum into the core's resident (8,128)
        # slab; every element carries the per-core partial CE sum.
        out_ref[...] += jnp.sum(per_row_ce)

    return kernel


def combined_loss(logits, targets, *, tile_n=None, alpha=ALPHA, gamma=GAMMA):
    """logits: (N, C) float (any float dtype), targets: (N,) int class indices.
    Returns scalar f32 focal-transformed mean cross-entropy."""
    n, c = logits.shape
    itemsize = jnp.dtype(logits.dtype).itemsize

    if tile_n is None:
        tile_n = _pick_tile_n(n, c, itemsize)
        # Keep both v7x TensorCores busy: never let a single tile swallow more
        # than ~half the batch once the batch is big enough to split.
        if n >= 8 * NUM_CORE_SPLITS:
            tile_n = min(tile_n, _round_up(-(-n // NUM_CORE_SPLITS), 8))

    # Validate/round tile_n against the (8,128) layout rule: either the full
    # batch (full-extent blocks are always legal) or a multiple of 8.
    tile_n = int(tile_n)
    if tile_n >= n:
        tile_n = n
    else:
        tile_n = max(8, tile_n // 8 * 8)

    total_tiles = pl.cdiv(n, tile_n)
    tiles_per_core = pl.cdiv(total_tiles, NUM_CORE_SPLITS)

    targets_col = targets.reshape(n, 1).astype(jnp.int32)

    def row_block_map(core, i):
        lb = core * tiles_per_core + i
        # Clamp overhang blocks (second core's tail); their rows are masked in-kernel.
        return (jnp.minimum(lb, total_tiles - 1), 0)

    def out_map(core, i):
        return (core, 0)   # per-core resident accumulator slab

    kernel = _make_kernel(n, c, tile_n, tiles_per_core)

    partial = pl.pallas_call(
        kernel,
        out_shape=jax.ShapeDtypeStruct((NUM_CORE_SPLITS * _OUT_SUB, _OUT_LANE), jnp.float32),
        grid_spec=pltpu.PrefetchScalarGridSpec(
            num_scalar_prefetch=0,
            grid=(NUM_CORE_SPLITS, tiles_per_core),
            in_specs=[
                pl.BlockSpec((tile_n, c), row_block_map),   # logits tile, native dtype in HBM
                pl.BlockSpec((tile_n, 1), row_block_map),   # target ids tile
            ],
            out_specs=pl.BlockSpec((_OUT_SUB, _OUT_LANE), out_map),
        ),
        compiler_params=pltpu.CompilerParams(
            dimension_semantics=("parallel", "arbitrary"),  # cores parallel, batch tiles reduced
            vmem_limit_bytes=_VMEM_LIMIT_BYTES,
        ),
    )(logits, targets_col)

    # Tiny epilogue in plain JAX: combine per-core partials, mean over the TRUE
    # batch size, then the focal transform (scalar work only).
    per_core = partial.reshape(NUM_CORE_SPLITS, _OUT_SUB, _OUT_LANE)[:, 0, 0]
    ce = jnp.sum(per_core) / n
    one_minus_pt = jnp.maximum(1.0 - jnp.exp(-ce), 0.0)   # clamp: rounding insurance
    g = float(gamma)
    if g == 2.0:
        focal = jnp.square(one_minus_pt)                  # one VPU mul, no pow/NaN hazard
    elif g.is_integer():
        focal = one_minus_pt ** int(g)
    else:
        focal = one_minus_pt ** g
    return (alpha * focal * ce).astype(jnp.float32)


def _reference(logits, targets, alpha=ALPHA, gamma=GAMMA):
    # Pure-JAX reference of F.cross_entropy(mean) + focal transform.
    logp = jax.nn.log_softmax(logits.astype(jnp.float32), axis=-1)
    nll = -jnp.take_along_axis(logp, targets[:, None].astype(jnp.int32), axis=-1)[:, 0]
    ce = jnp.mean(nll)
    pt = jnp.exp(-ce)
    return alpha * (1.0 - pt) ** gamma * ce


if __name__ == "__main__":
    key = jax.random.PRNGKey(0)
    k1, k2, k3, k4 = jax.random.split(key, 4)

    # Small demo: 20 rows (not a multiple of 8/tile), 32 classes, f32.
    N, C = 20, 32
    logits = jax.random.normal(k1, (N, C), dtype=jnp.float32)
    targets = jax.random.randint(k2, (N,), 0, C, dtype=jnp.int32)
    ref = _reference(logits, targets)

    # Multi-tile path with a ragged last tile (tile of 8 -> 3 tiles over 2 "cores").
    loss_tiled = combined_loss(logits, targets, tile_n=8)
    jax.block_until_ready(loss_tiled)
    assert jnp.allclose(loss_tiled, ref, atol=1e-5, rtol=1e-5), (loss_tiled, ref)

    # Default auto-tiled path.
    loss_auto = combined_loss(logits, targets)
    jax.block_until_ready(loss_auto)
    assert jnp.allclose(loss_auto, ref, atol=1e-5, rtol=1e-5), (loss_auto, ref)

    # bf16 logits streamed in native dtype, upcast in-kernel.
    N2, C2 = 200, 64
    logits_bf16 = jax.random.normal(k3, (N2, C2), dtype=jnp.bfloat16)
    targets2 = jax.random.randint(k4, (N2,), 0, C2, dtype=jnp.int32)
    ref2 = _reference(logits_bf16, targets2)
    loss_bf16 = combined_loss(logits_bf16, targets2)
    jax.block_until_ready(loss_bf16)
    assert jnp.allclose(loss_bf16, ref2, atol=1e-4, rtol=1e-4), (loss_bf16, ref2)

    print("KERNEL_OK")
</pallas_src>

<mosaic_0001>
module attributes {stable_mosaic.version = 11 : i64} {
  func.func @kernel(%arg0: i32, %arg1: i32, %arg2: memref<8x32xf32, #tpu.memory_space<vmem>>, %arg3: memref<8x1xi32, #tpu.memory_space<vmem>>, %arg4: memref<8x128xf32, #tpu.memory_space<vmem>>) attributes {dimension_semantics = [#tpu.dimension_semantics<parallel>, #tpu.dimension_semantics<arbitrary>], iteration_bounds = array<i64: 2, 2>, scalar_prefetch = 0 : i64, scratch_operands = 0 : i64, tpu.core_type = #tpu.core_type<tc>, window_params = [{transform_indices = @transform_0, window_bounds = array<i64: 8, 32>}, {transform_indices = @transform_1, window_bounds = array<i64: 8, 1>}, {transform_indices = @transform_2, window_bounds = array<i64: 8, 128>}]} {
    %c0_i32 = arith.constant 0 : i32
    %0 = arith.cmpi eq, %arg1, %c0_i32 : i32
    %1 = arith.extui %0 : i1 to i32
    %c0_i32_0 = arith.constant 0 : i32
    %2 = arith.cmpi ne, %1, %c0_i32_0 : i32
    scf.if %2 {
      %cst_13 = arith.constant 0.000000e+00 : f32
      %40 = vector.broadcast %cst_13 : f32 to vector<8x128xf32>
      %c0_14 = arith.constant 0 : index
      %c0_15 = arith.constant 0 : index
      %41 = vector.load %arg4[%c0_14, %c0_15] : memref<8x128xf32, #tpu.memory_space<vmem>>, vector<8x128xf32>
      tpu.vector_store %arg4[%c0_14, %c0_15], %40 {strides = array<i32>} : memref<8x128xf32, #tpu.memory_space<vmem>>, vector<8x128xf32>,
    } else {
    }
    %c0 = arith.constant 0 : index
    %c0_1 = arith.constant 0 : index
    %3 = vector.load %arg2[%c0, %c0_1] : memref<8x32xf32, #tpu.memory_space<vmem>>, vector<8x32xf32>
    %c0_2 = arith.constant 0 : index
    %c0_3 = arith.constant 0 : index
    %4 = vector.load %arg3[%c0_2, %c0_3] : memref<8x1xi32, #tpu.memory_space<vmem>>, vector<8x1xi32>
    %c2_i32 = arith.constant 2 : i32
    %5 = arith.muli %arg0, %c2_i32 : i32
    %6 = arith.addi %5, %arg1 : i32
    %c8_i32 = arith.constant 8 : i32
    %7 = arith.muli %6, %c8_i32 : i32
    %8 = tpu.iota {dimensions = array<i32: 0>} : vector<8x1xi32>
    %9 = vector.broadcast %7 : i32 to vector<8x1xi32>
    %10 = arith.addi %9, %8 : vector<8x1xi32>
    %c20_i32 = arith.constant 20 : i32
    %11 = vector.broadcast %c20_i32 : i32 to vector<8x1xi32>
    %12 = arith.cmpi slt, %10, %11 : vector<8x1xi32>
    %cst = arith.constant dense<0xFF800000> : vector<8xf32>
    %13 = vector.multi_reduction <maximumf>, %3, %cst [1] : vector<8x32xf32> to vector<8xf32>
    %14 = vector.shape_cast %13 : vector<8xf32> to vector<8x1xf32>
    %15 = vector.broadcast %14 : vector<8x1xf32> to vector<8x32xf32>
    %16 = arith.subf %3, %15 : vector<8x32xf32>
    %17 = math.exp %16 : vector<8x32xf32>
    %cst_4 = arith.constant dense<0.000000e+00> : vector<8xf32>
    %18 = vector.multi_reduction <add>, %17, %cst_4 [1] : vector<8x32xf32> to vector<8xf32>
    %19 = vector.shape_cast %18 : vector<8xf32> to vector<8x1xf32>
    %20 = math.log %19 : vector<8x1xf32>
    %21 = arith.addf %14, %20 : vector<8x1xf32>
    %22 = tpu.iota {dimensions = array<i32: 1>} : vector<8x32xi32>
    %23 = vector.broadcast %4 : vector<8x1xi32> to vector<8x32xi32>
    %24 = arith.cmpi eq, %22, %23 : vector<8x32xi32>
    %cst_5 = arith.constant 0.000000e+00 : f32
    %25 = vector.broadcast %cst_5 : f32 to vector<8x32xf32>
    %26 = arith.select %24, %3, %25 : vector<8x32xi1>, vector<8x32xf32>
    %cst_6 = arith.constant dense<0.000000e+00> : vector<8xf32>
    %27 = vector.multi_reduction <add>, %26, %cst_6 [1] : vector<8x32xf32> to vector<8xf32>
    %28 = vector.shape_cast %27 : vector<8xf32> to vector<8x1xf32>
    %29 = arith.subf %21, %28 : vector<8x1xf32>
    %cst_7 = arith.constant 0.000000e+00 : f32
    %30 = vector.broadcast %cst_7 : f32 to vector<8x1xf32>
    %31 = arith.select %12, %29, %30 : vector<8x1xi1>, vector<8x1xf32>
    %c0_8 = arith.constant 0 : index
    %c0_9 = arith.constant 0 : index
    %32 = vector.load %arg4[%c0_8, %c0_9] : memref<8x128xf32, #tpu.memory_space<vmem>>, vector<8x128xf32>
    %33 = vector.shape_cast %31 : vector<8x1xf32> to vector<1x8x1xf32>
    %cst_10 = arith.constant dense<0.000000e+00> : vector<1xf32>
    %34 = vector.multi_reduction <add>, %33, %cst_10 [1, 2] : vector<1x8x1xf32> to vector<1xf32>
    %35 = vector.shape_cast %34 : vector<1xf32> to vector<1x1x1xf32>
    %36 = vector.extract %35[0, 0, 0] : f32 from vector<1x1x1xf32>
    %37 = vector.broadcast %36 : f32 to vector<8x128xf32>
    %38 = arith.addf %32, %37 : vector<8x128xf32>
    %c0_11 = arith.constant 0 : index
    %c0_12 = arith.constant 0 : index
    %39 = vector.load %arg4[%c0_11, %c0_12] : memref<8x128xf32, #tpu.memory_space<vmem>>, vector<8x128xf32>
    tpu.vector_store %arg4[%c0_11, %c0_12], %38 {strides = array<i32>} : memref<8x128xf32, #tpu.memory_space<vmem>>, vector<8x128xf32>,
    return
  }
  func.func @transform_0(%arg0: i32, %arg1: i32) -> (i32, i32) {
    %c2_i32 = arith.constant 2 : i32
    %0 = arith.muli %arg0, %c2_i32 : i32
    %1 = arith.addi %0, %arg1 : i32
    %c2_i32_0 = arith.constant 2 : i32
    %2 = arith.minsi %1, %c2_i32_0 : i32
    %c0_i32 = arith.constant 0 : i32
    %c0_i32_1 = arith.constant 0 : i32
    return %2, %c0_i32 : i32, i32
  }
  func.func @transform_1(%arg0: i32, %arg1: i32) -> (i32, i32) {
    %c2_i32 = arith.constant 2 : i32
    %0 = arith.muli %arg0, %c2_i32 : i32
    %1 = arith.addi %0, %arg1 : i32
    %c2_i32_0 = arith.constant 2 : i32
    %2 = arith.minsi %1, %c2_i32_0 : i32
    %c0_i32 = arith.constant 0 : i32
    %c0_i32_1 = arith.constant 0 : i32
    return %2, %c0_i32 : i32, i32
  }
  func.func @transform_2(%arg0: i32, %arg1: i32) -> (i32, i32) {
    %c0_i32 = arith.constant 0 : i32
    %c0_i32_0 = arith.constant 0 : i32
    return %arg0, %c0_i32 : i32, i32
  }
}

</mosaic_0001>

<llo_original>
// kernel: tpu_custom_call.1
$region0: #{tpu_custom_call.1}
  #allocation0 [shape = 'u32[]', space=smem, size = 0x4, offset = 0x4, fixed_abs, tag = 'smem constant byte address 0x4 - core index']
  #allocation1 [shape = 'u32[144,128]{1,0:T(1,128)}', space=vmem, size = 0x12000, scoped, tag = 'internal scratch']
  %s0 = inlined_call_operand.vmem [shape: f32[20,32], index: 0, kind: input, shape index: {}]
  %s1 = inlined_call_operand.vmem [shape: s32[20,1], index: 1, kind: input, shape index: {}]
  %s2 = inlined_call_operand.hbm [shape: f32[16,128], index: 2, kind: output, shape index: {}]
  %s3 = sld [smem:[#allocation0]]
  $region45: #{tpu_custom_call.1} parent=0
    _
  %s5 = ssub.s32 1, %s3
  %s6 = scalar_select 0, %s5, %s3
  $region1: #{tpu_custom_call.1} parent=0
    #allocation2 [shape = 'u8[8192]{0}', space=vmem, size = 0x2000, scoped, tag = 'output window, operand 0']
    #allocation3 [shape = 's32[2]{0}', space=sflag, size = 0x8, scoped, tag = 'scoped memory for tpu_custom_call.1']
    %7 = vsyncpa [#allocation3], 0
    %s8 = scalar_lea.sflag [#allocation3], 1
    %9 = vsyncpa %s8, 0
    loop: start=0, step=1, limit=6
    $region2: #{tpu_custom_call.1} parent=1 // loop_pre_header
      _
    $region3: #{tpu_custom_call.1} parent=1 // loop_header
      %s11 = sphi 0, %s15
      %p12 = scmp.ge.s32.totalorder %s11, 6
      %s18 = sphi 0, %s30
      %s19 = sphi 0, %s26
      %s20 = sphi 0, %s18
      %s21 = sphi 0, %s19
      %s22 = sphi 0, %s20
      %s23 = sphi 0, %s21
      %s41 = sphi 0, %s43
      %s44 = sphi 0, %s41
      %s45 = sphi 0, %s44
      %s61 = sphi 0, %s45
      %s75 = sphi 0, %s77
      %s78 = sphi 0, %s75
      %s79 = sphi 0, %s78
      %s95 = sphi 0, %s79
      %s101 = sphi 0, %s103
      %s104 = sphi 0, %s101
      %s105 = sphi 0, %s104
      %s121 = sphi 0, %s105
    $region4: #{tpu_custom_call.1} parent=1 // loop_header_branch
      %14 = sbr.rel (%p12) target = $region8
    $region5: #{tpu_custom_call.1} parent=1 // loop_body
      %s16 = ssub.s32 %s11, 1
      %s17 = ssub.s32 %s11, 2
      %s24 = sadd.s32 1, %s19
      %p25 = scmp.ge.s32.totalorder %s24, 2
      %s26 = scalar_select %p25, 0, %s24
      %s27 = sadd.s32 1, %s18
      %s28 = scalar_select %p25, %s27, %s18
      %p29 = scmp.ge.s32.totalorder %s28, 2
      %s30 = scalar_select %p29, 0, %s28
      %s31 = smul.u32 %s18, 2
      %s32 = sadd.s32 %s31, %s19
      %p33 = scmp.lt.s32.totalorder %s32, 2
      %s34 = scalar_select %p33, %s32, 2
      %s35 = smul.u32 %s30, 2
      %s36 = sadd.s32 %s35, %s26
      %p37 = scmp.lt.s32.totalorder %s36, 2
      %s38 = scalar_select %p37, %s36, 2
      %s39 = ssub.s32 %s34, %s38
      %p40 = scmp.eq.s32.totalorder %s39, 0
      %s42 = sadd.s32 %s41, 1
      %s43 = scalar_select %p40, %s41, %s42
      %p46 = pneg %p40
      %p47 = scmp.eq.s32.totalorder %s11, 3
      %p48 = por %p46, %p47
      %p49 = scmp.ne.s32.totalorder %s41, %s44
      %p50 = scmp.eq.s32.totalorder %s11, 0
      %p51 = por %p49, %p50
      %p52 = scmp.ne.s32.totalorder %s41, %s44
      %p53 = scmp.eq.s32.totalorder %s16, 3
      %p54 = por %p52, %p53
      %p55 = scmp.ne.s32.totalorder %s44, %s45
      %p56 = scmp.eq.s32.totalorder %s16, 0
      %p57 = por %p55, %p56
      %p58 = scmp.ne.s32.totalorder %s44, %s45
      %p59 = scmp.eq.s32.totalorder %s17, 3
      %p60 = por %p58, %p59
      %p62 = scmp.ne.s32.totalorder %s45, %s61
      %p63 = scmp.eq.s32.totalorder %s17, 0
      %p64 = por %p62, %p63
      %s65 = smul.u32 %s18, 2
      %s66 = sadd.s32 %s65, %s19
      %p67 = scmp.lt.s32.totalorder %s66, 2
      %s68 = scalar_select %p67, %s66, 2
      %s69 = smul.u32 %s30, 2
      %s70 = sadd.s32 %s69, %s26
      %p71 = scmp.lt.s32.totalorder %s70, 2
      %s72 = scalar_select %p71, %s70, 2
      %s73 = ssub.s32 %s68, %s72
      %p74 = scmp.eq.s32.totalorder %s73, 0
      %s76 = sadd.s32 %s75, 1
      %s77 = scalar_select %p74, %s75, %s76
      %p80 = pneg %p74
      %p81 = scmp.eq.s32.totalorder %s11, 3
      %p82 = por %p80, %p81
      %p83 = scmp.ne.s32.totalorder %s75, %s78
      %p84 = scmp.eq.s32.totalorder %s11, 0
      %p85 = por %p83, %p84
      %p86 = scmp.ne.s32.totalorder %s75, %s78
      %p87 = scmp.eq.s32.totalorder %s16, 3
      %p88 = por %p86, %p87
      %p89 = scmp.ne.s32.totalorder %s78, %s79
      %p90 = scmp.eq.s32.totalorder %s16, 0
      %p91 = por %p89, %p90
      %p92 = scmp.ne.s32.totalorder %s78, %s79
      %p93 = scmp.eq.s32.totalorder %s17, 3
      %p94 = por %p92, %p93
      %p96 = scmp.ne.s32.totalorder %s79, %s95
      %p97 = scmp.eq.s32.totalorder %s17, 0
      %p98 = por %p96, %p97
      %s99 = ssub.s32 %s18, %s30
      %p100 = scmp.eq.s32.totalorder %s99, 0
      %s102 = sadd.s32 %s101, 1
      %s103 = scalar_select %p100, %s101, %s102
      %p106 = pneg %p100
      %p107 = scmp.eq.s32.totalorder %s11, 3
      %p108 = por %p106, %p107
      %p109 = scmp.ne.s32.totalorder %s101, %s104
      %p110 = scmp.eq.s32.totalorder %s11, 0
      %p111 = por %p109, %p110
      %p112 = scmp.ne.s32.totalorder %s101, %s104
      %p113 = scmp.eq.s32.totalorder %s16, 3
      %p114 = por %p112, %p113
      %p115 = scmp.ne.s32.totalorder %s104, %s105
      %p116 = scmp.eq.s32.totalorder %s16, 0
      %p117 = por %p115, %p116
      %p118 = scmp.ne.s32.totalorder %s104, %s105
      %p119 = scmp.eq.s32.totalorder %s17, 3
      %p120 = por %p118, %p119
      %p122 = scmp.ne.s32.totalorder %s105, %s121
      %p123 = scmp.eq.s32.totalorder %s17, 0
      %p124 = por %p122, %p123
      %p125 = scmp.le.s32.totalorder 1, %s11
      %p126 = scmp.lt.s32.totalorder %s11, 5
      %p127 = pnand %p125, %p126
      %p128 = pneg %p127
      // Predicated region
      $region9: #{tpu_custom_call.1} parent=5 // pred_check
        _
      $region10: #{tpu_custom_call.1} parent=5 // pred_check_branch
        %130 = sbr.rel (%p127) target = $region12
      $region11: #{tpu_custom_call.1} parent=5 // pred_region
        %s131 = ssub.s32 %s11, 1
      $region12: #{tpu_custom_call.1} parent=5 // pred_fallthru
        _
      %p132 = scmp.lt.s32.totalorder %s11, 4
      // Predicated region
      $region13: #{tpu_custom_call.1} parent=5 // pred_check
        %p133 = pneg %p132
      $region14: #{tpu_custom_call.1} parent=5 // pred_check_branch
        %135 = sbr.rel (%p133) target = $region16
      $region15: #{tpu_custom_call.1} parent=5 // pred_region
        // Predicated region
        $region17: #{tpu_custom_call.1} parent=15 // pred_check
          %p136 = pneg %p51
        $region18: #{tpu_custom_call.1} parent=15 // pred_check_branch
          %138 = sbr.rel (%p136) target = $region20
        $region19: #{tpu_custom_call.1} parent=15 // pred_region
          %s139 = smul.u32 %s18, 2
          %s140 = sadd.s32 %s139, %s19
          %p141 = scmp.lt.s32.totalorder %s140, 2
          %s142 = scalar_select %p141, %s140, 2
          %p143 = scmp.lt.s32.totalorder %s142, 2
          %s144 = scalar_select %p143, %s142, 2
          %s145 = smul.addr %s144, 8
          %s146 = scalar_lea.vmem %s0, %s145
          %s147 = smul.u32 %s18, 2
          %s148 = sadd.s32 %s147, %s19
          %p149 = scmp.lt.s32.totalorder %s148, 2
          %s150 = scalar_select %p149, %s148, 2
        $region20: #{tpu_custom_call.1} parent=15 // pred_fallthru
          _
        // Predicated region
        $region21: #{tpu_custom_call.1} parent=15 // pred_check
          %p151 = pneg %p85
        $region22: #{tpu_custom_call.1} parent=15 // pred_check_branch
          %153 = sbr.rel (%p151) target = $region24
        $region23: #{tpu_custom_call.1} parent=15 // pred_region
          %s154 = smul.u32 %s18, 2
          %s155 = sadd.s32 %s154, %s19
          %p156 = scmp.lt.s32.totalorder %s155, 2
          %s157 = scalar_select %p156, %s155, 2
          %p158 = scmp.lt.s32.totalorder %s157, 2
          %s159 = scalar_select %p158, %s157, 2
          %s160 = smul.addr %s159, 8
          %s161 = scalar_lea.vmem %s1, %s160
          %s162 = smul.u32 %s18, 2
          %s163 = sadd.s32 %s162, %s19
          %p164 = scmp.lt.s32.totalorder %s163, 2
          %s165 = scalar_select %p164, %s163, 2
        $region24: #{tpu_custom_call.1} parent=15 // pred_fallthru
          _
      $region16: #{tpu_custom_call.1} parent=5 // pred_fallthru
        _
      %p166 = scmp.le.s32.totalorder 1, %s11
      %p167 = scmp.lt.s32.totalorder %s11, 5
      %p168 = pnand %p166, %p167
      %p169 = pneg %p168
      // Predicated region
      $region25: #{tpu_custom_call.1} parent=5 // pred_check
        _
      $region26: #{tpu_custom_call.1} parent=5 // pred_check_branch
        %171 = sbr.rel (%p168) target = $region28
      $region27: #{tpu_custom_call.1} parent=5 // pred_region
        %s172 = ssub.s32 %s11, 1
        %s173 = smul.u32 %s20, 2
        %s174 = sadd.s32 %s173, %s21
        %p175 = scmp.lt.s32.totalorder %s174, 2
        %s176 = scalar_select %p175, %s174, 2
        %p177 = scmp.lt.s32.totalorder %s176, 2
        %s178 = scalar_select %p177, %s176, 2
        %s179 = smul.addr %s178, 8
        %s180 = scalar_lea.vmem %s0, %s179
        %p181 = pneg %p57
        %p182 = pneg %p54
        %s183 = smul.u32 %s20, 2
        %s184 = sadd.s32 %s183, %s21
        %p185 = scmp.lt.s32.totalorder %s184, 2
        %s186 = scalar_select %p185, %s184, 2
        %p187 = scmp.lt.s32.totalorder %s186, 2
        %s188 = scalar_select %p187, %s186, 2
        %s189 = smul.addr %s188, 8
        %s190 = scalar_lea.vmem %s1, %s189
        %p191 = pneg %p91
        %p192 = pneg %p88
        %p193 = pneg %p117
        %p194 = pneg %p114
        %s195 = sand.u32 %s104, 1
        %s196 = scalar_lea.sflag [#allocation3], %s195
        %s197 = sand.u32 %s104, 1
        %s198 = smul.addr %s197, 8
        %s199 = scalar_lea.vmem [#allocation2], %s198
        %s200 = smul.u32 %s20, 2
        %s201 = sadd.s32 %s200, %s21
        %p202 = scmp.lt.s32.totalorder %s201, 2
        %s203 = scalar_select %p202, %s201, 2
        %p204 = scmp.lt.s32.totalorder %s203, 2
        %s205 = scalar_select %p204, %s203, 2
        %s206 = smul.addr %s205, 8
        %s207 = scalar_lea.vmem %s0, %s206
        %s208 = smul.u32 %s20, 2
        %s209 = sadd.s32 %s208, %s21
        %p210 = scmp.lt.s32.totalorder %s209, 2
        %s211 = scalar_select %p210, %s209, 2
        %s212 = smul.u32 %s20, 2
        %s213 = sadd.s32 %s212, %s21
        %p214 = scmp.lt.s32.totalorder %s213, 2
        %s215 = scalar_select %p214, %s213, 2
        %p216 = scmp.lt.s32.totalorder %s215, 2
        %s217 = scalar_select %p216, %s215, 2
        %s218 = smul.addr %s217, 8
        %s219 = scalar_lea.vmem %s1, %s218
        %s220 = smul.u32 %s20, 2
        %s221 = sadd.s32 %s220, %s21
        %p222 = scmp.lt.s32.totalorder %s221, 2
        %s223 = scalar_select %p222, %s221, 2
        %p224 = scmp.eq.s32.totalorder %s21, 0
        // Predicated region
        $region29: #{tpu_custom_call.1} parent=27 // pred_check
          %p225 = pneg %p224
        $region30: #{tpu_custom_call.1} parent=27 // pred_check_branch
          %227 = sbr.rel (%p225) target = $region32
        $region31: #{tpu_custom_call.1} parent=27 // pred_region
          %228 = vst [vmem:[%s199] sm:$0xff] 0.0
        $region32: #{tpu_custom_call.1} parent=27 // pred_fallthru
          _
        %v229 = vld [vmem:[%s207] sm:$0xff]
        %v230 = vld [vmem:[%s219] sm:$0xff]
        %s231 = smul.u32 %s20, 2
        %s232 = sadd.s32 %s231, %s21
        %s233 = smul.u32 %s232, 8
        %v234 = vlaneseq
        %v235 = vshrl.u32 %v234, 7
        %v236 = vstv %s233
        %v237 = vadd.s32 %v236, %v235
        %vm238 = vcmp.lt.s32.totalorder %v237, 20
        %vm239 = vcmask 261120
        %v240 = vsel %vm239, %v229, -inf
        %241 = vmax.xlane.f32.xlu0 %v240
        %v242 = vpop.xlane.xlu0 %241
        %v243 = vsub.f32 %v229, %v242
        %v244 = vmul.f32 %v243, 1.442695
        %v245 = vpow.pop %v244
        %v246 = vsel %vm239, %v245, 0.0
        %247 = vadd.xlane.f32.xlu0 %v246
        %v248 = vpop.xlane.xlu0 %247
        %v249 = vlog2.pop %v248
        %v250 = vmul.f32 %v249, 0.6931472
        %v251 = vadd.f32 %v242, %v250
        %v252 = vlaneseq
        %v253 = vand.u32 %v252, 127
        %254 = vset.pattern.permute.xlu0 0
        %255 = vperm.xlu0 %254, %v230
        %v256 = vpop.permute.xlu0 %255
        %vm257 = vcmp.eq.s32.totalorder %v253, %v256
        %v258 = vsel %vm257, %v229, 0.0
        %v259 = vsel %vm239, %v258, 0.0
        %260 = vadd.xlane.f32.xlu0 %v259
        %v261 = vpop.xlane.xlu0 %260
        %v262 = vsub.f32 %v251, %v261
        %v263 = vsel %vm238, %v262, 0.0
        %v264 = vld [vmem:[%s199] sm:$0xff]
        %vm265 = vcmask 7168
        %v266 = vsel %vm265, %v263, 0.0
        %267 = vadd.xlane.f32.xlu0 %v266
        %v268 = vpop.xlane.xlu0 %267
        %v269 = vrot.slane %v268, 4
        %v270 = vadd.f32 %v268, %v269
        %v271 = vrot.slane %v270, 2
        %v272 = vadd.f32 %v270, %v271
        %v273 = vrot.slane %v272, 1
        %v274 = vadd.f32 %v272, %v273
        %s275 = vtos %v274
        %v276 = vstv %s275
        %v277 = vadd.f32 %v264, %v276
        %278 = vst [vmem:[%s199] sm:$0xff] %v277
        %s279 = sand.u32 %s104, 1
        %s280 = scalar_lea.sflag [#allocation3], %s279
        %s281 = sand.u32 %s104, 1
        %s282 = smul.addr %s281, 8
        %s283 = scalar_lea.vmem [#allocation2], %s282
        // Predicated region
        $region33: #{tpu_custom_call.1} parent=27 // pred_check
          %p284 = pneg %p114
        $region34: #{tpu_custom_call.1} parent=27 // pred_check_branch
          %286 = sbr.rel (%p284) target = $region36
        $region35: #{tpu_custom_call.1} parent=27 // pred_region
          %s288 = ssub.s32 128, 128
          %289 = vsyncadd %s280, %s288
          %s290 = smul.addr %s20, 128
          %s291 = scalar_lea.hbm %s2, %s290
          %s293 = sshll.u32 %s283, 4
          %s294 = int_to_ptr.vmem [resolvable:$true] %s293
          %296 = dma.vmem_to_hbm [thread:$0]  %s294, 128, %s291, %s280
        $region36: #{tpu_custom_call.1} parent=27 // pred_fallthru
          _
      $region28: #{tpu_custom_call.1} parent=5 // pred_fallthru
        _
      %p297 = scmp.le.s32.totalorder 2, %s11
      // Predicated region
      $region37: #{tpu_custom_call.1} parent=5 // pred_check
        %p298 = pneg %p297
      $region38: #{tpu_custom_call.1} parent=5 // pred_check_branch
        %300 = sbr.rel (%p298) target = $region40
      $region39: #{tpu_custom_call.1} parent=5 // pred_region
        %s301 = ssub.s32 %s11, 2
        // Predicated region
        $region41: #{tpu_custom_call.1} parent=39 // pred_check
          %p302 = pneg %p120
        $region42: #{tpu_custom_call.1} parent=39 // pred_check_branch
          %304 = sbr.rel (%p302) target = $region44
        $region43: #{tpu_custom_call.1} parent=39 // pred_region
          %s305 = sand.u32 %s105, 1
          %s306 = scalar_lea.sflag [#allocation3], %s305
          %s307 = sand.u32 %s105, 1
          %s308 = smul.addr %s307, 8
          %s309 = scalar_lea.vmem [#allocation2], %s308
          %310 = dma.done %s306, 128
        $region44: #{tpu_custom_call.1} parent=39 // pred_fallthru
          _
      $region40: #{tpu_custom_call.1} parent=5 // pred_fallthru
        _
    $region6: #{tpu_custom_call.1} parent=1 // loop_footer
      %s15 = sadd.s32 1, %s11
    $region7: #{tpu_custom_call.1} parent=1 // loop_footer_branch
      %10 = sbr.rel target = $region3
    $region8: #{tpu_custom_call.1} parent=1 // loop_exit
      _
    %311 = vsyncpa [#allocation3], 1
    %s312 = scalar_lea.sflag [#allocation3], 1
    %313 = vsyncpa %s312, 1

</llo_original>
